<compile_context>
chip_gen: v7x
topology: tpu7x:2x2x1
jax: 0.10.0
libtpu: 0.0.40
codegen_flags: <defaults>
</compile_context>

<pallas_src>
import jax
import jax.numpy as jnp
from jax.experimental import pallas as pl
from jax.experimental.pallas import tpu as pltpu


def encoder_gru_kernel(ids_ref,    # VMEM (T*B, 1) int32 token ids, row = t*B + b
                       emb_ref,    # VMEM (V+1, E) f32 embedding table (row 0 = pad = 0)
                       wi_ref,     # VMEM (E, 3H) fused input weights   [r|z|n]
                       wh_ref,     # VMEM (H, 3H) fused hidden weights  [r|z|n]
                       bi_ref,     # VMEM (1, 3H) b_ih
                       bh_ref,     # VMEM (1, 3H) b_hh
                       h_out_ref): # VMEM (B, H) final hidden state
    B, H = h_out_ref.shape
    TB = ids_ref.shape[0]
    T = TB // B
    V1 = emb_ref.shape[0]

    # ---- Embedding gather as a one-hot matmul (single MXU op, no scalar loads) ----
    ids = ids_ref[...]                                           # (T*B, 1) int32
    iota = jax.lax.broadcasted_iota(jnp.int32, (TB, V1), 1)      # (T*B, V+1)
    onehot = (iota == ids).astype(jnp.float32)                   # exact row select
    x_all = jnp.dot(onehot, emb_ref[...],
                    preferred_element_type=jnp.float32)          # (T*B, E)

    # ---- Input-gate path hoisted out of the recurrence: one well-filled matmul ----
    gi_all = jnp.dot(x_all, wi_ref[...],
                     preferred_element_type=jnp.float32) + bi_ref[...]   # (T*B, 3H)

    wh = wh_ref[...]
    bh = bh_ref[...]

    h = jnp.zeros((B, H), jnp.float32)

    # Recurrence: T static (fully unrolled) steps; per step one (B,H)x(H,3H) MXU
    # matmul, one sigmoid over the packed 3H slab and one tanh (2 EUP pushes).
    for t in range(T):
        gi = gi_all[t * B:(t + 1) * B, :]                               # (B, 3H) static slice
        gh = jnp.dot(h, wh, preferred_element_type=jnp.float32) + bh    # (B, 3H)
        s = jax.nn.sigmoid(gi + gh)        # one EUP pass; r, z sliced out below
        r = s[:, 0 * H:1 * H]
        z = s[:, 1 * H:2 * H]
        n = jnp.tanh(gi[:, 2 * H:3 * H] + r * gh[:, 2 * H:3 * H])
        h = (1.0 - z) * n + z * h

    h_out_ref[...] = h.astype(h_out_ref.dtype)


def encoder_forward(question, emb_table, wi, wh, bi, bh):
    """question: (B, T) int32 in [0, V].  Returns final hidden state (B, H) f32."""
    B, T = question.shape
    V1, E = emb_table.shape
    H = wh.shape[0]
    TB = T * B

    # Row ordering t*B + b so each timestep's rows of the hoisted GI are contiguous.
    ids = question.astype(jnp.int32).T.reshape(TB, 1)

    full2 = lambda i: (0, 0)

    flops = (2 * TB * V1 * E            # one-hot gather matmul
             + 2 * TB * E * 3 * H       # hoisted input-gate matmul
             + T * 2 * B * H * 3 * H    # per-step hidden matmuls
             + T * B * 3 * H * 8)       # gate elementwise
    transcendentals = T * B * 4 * H     # sigmoid(3H) + tanh(H) per step
    bytes_accessed = 4 * (TB + V1 * E + E * 3 * H + H * 3 * H + 2 * 3 * H + B * H)

    h_final = pl.pallas_call(
        encoder_gru_kernel,
        out_shape=jax.ShapeDtypeStruct((B, H), jnp.float32),
        grid_spec=pltpu.PrefetchScalarGridSpec(
            num_scalar_prefetch=0,
            grid=(1,),                       # single invocation; time loop is in-kernel
            in_specs=[
                pl.BlockSpec((TB, 1), full2),      # token ids (VMEM int32)
                pl.BlockSpec((V1, E), full2),      # embedding table, dense 2D
                pl.BlockSpec((E, 3 * H), full2),   # fused W_ih^T
                pl.BlockSpec((H, 3 * H), full2),   # fused W_hh^T
                pl.BlockSpec((1, 3 * H), full2),   # b_ih
                pl.BlockSpec((1, 3 * H), full2),   # b_hh
            ],
            out_specs=pl.BlockSpec((B, H), full2),
        ),
        compiler_params=pltpu.CompilerParams(
            dimension_semantics=("arbitrary",)),
        cost_estimate=pl.CostEstimate(
            flops=flops, transcendentals=transcendentals,
            bytes_accessed=bytes_accessed),
    )(ids, emb_table, wi, wh, bi, bh)
    return h_final


class EncoderNetPallas:
    """Deterministically initialized Embedding + GRU encoder (PyTorch EncoderNet)."""

    def __init__(self, emb_size, vocab_size, hidden_size, key):
        self.emb_size = emb_size
        self.vocab_size = vocab_size
        self.hidden_size = hidden_size

        k_emb, k_wih, k_whh, k_bih, k_bhh = jax.random.split(key, 5)

        # nn.Embedding(vocab_size + 1, emb_size, padding_idx=0): N(0,1), row 0 = 0.
        # Stored dense 2D (V+1, E): lane/sublane-packed, exactly what the one-hot
        # matmul gather wants (and the layout that survives larger vocabs on v7x).
        emb = jax.random.normal(k_emb, (vocab_size + 1, emb_size), jnp.float32)
        self.emb_table = emb.at[0].set(0.0)

        # nn.GRU(emb_size, hidden_size): U(-1/sqrt(H), 1/sqrt(H)), gate order r, z, n.
        H, E = hidden_size, emb_size
        bound = 1.0 / jnp.sqrt(jnp.float32(H))
        w_ih = jax.random.uniform(k_wih, (3 * H, E), jnp.float32, -bound, bound)
        w_hh = jax.random.uniform(k_whh, (3 * H, H), jnp.float32, -bound, bound)
        b_ih = jax.random.uniform(k_bih, (3 * H,), jnp.float32, -bound, bound)
        b_hh = jax.random.uniform(k_bhh, (3 * H,), jnp.float32, -bound, bound)

        # Fused weights for x @ W layout: columns ordered [r | z | n].
        self.wi = w_ih.T            # (E, 3H)
        self.wh = w_hh.T            # (H, 3H)
        self.bi = b_ih.reshape(1, 3 * H)
        self.bh = b_hh.reshape(1, 3 * H)

    def __call__(self, question):
        """question: (B, T) int32 token ids in [0, vocab_size]. Returns (1, B, H)."""
        h = encoder_forward(question.astype(jnp.int32), self.emb_table,
                            self.wi, self.wh, self.bi, self.bh)   # (B, H)
        return h[None, :, :]   # (num_layers=1, B, H) == qenc of nn.GRU(batch_first)


def gru_reference(question, net):
    """Pure-JAX reference of embedding + GRU (PyTorch semantics) for a sanity check."""
    H = net.hidden_size
    hp = jax.lax.Precision.HIGHEST
    qemb = jnp.take(net.emb_table, question, axis=0)          # (B, T, E)
    B, T, _ = qemb.shape
    h = jnp.zeros((B, H), jnp.float32)
    for t in range(T):
        x = qemb[:, t, :]
        gi = jnp.dot(x, net.wi, precision=hp) + net.bi
        gh = jnp.dot(h, net.wh, precision=hp) + net.bh
        r = jax.nn.sigmoid(gi[:, 0 * H:1 * H] + gh[:, 0 * H:1 * H])
        z = jax.nn.sigmoid(gi[:, 1 * H:2 * H] + gh[:, 1 * H:2 * H])
        n = jnp.tanh(gi[:, 2 * H:3 * H] + r * gh[:, 2 * H:3 * H])
        h = (1.0 - z) * n + z * h
    return h[None, :, :]


if __name__ == "__main__":
    key = jax.random.PRNGKey(0)
    k_params, k_tok = jax.random.split(key)

    emb_size, vocab_size, hidden_size = 32, 20, 32
    B, T = 2, 8

    net = EncoderNetPallas(emb_size, vocab_size, hidden_size, k_params)
    question = jax.random.randint(k_tok, (B, T), 0, vocab_size + 1, jnp.int32)

    qenc = net(question)
    qenc = jax.block_until_ready(qenc)

    ref = gru_reference(question, net)
    assert qenc.shape == (1, B, hidden_size)
    assert jnp.allclose(qenc, ref, atol=1e-4, rtol=1e-4), \
        f"max abs err {jnp.max(jnp.abs(qenc - ref))}"

    print("KERNEL_OK")
</pallas_src>

<mosaic_0001>
module attributes {stable_mosaic.version = 11 : i64} {
  func.func @encoder_gru_kernel(%arg0: i32, %arg1: memref<16x1xi32, #tpu.memory_space<vmem>>, %arg2: memref<21x32xf32, #tpu.memory_space<vmem>>, %arg3: memref<32x96xf32, #tpu.memory_space<vmem>>, %arg4: memref<32x96xf32, #tpu.memory_space<vmem>>, %arg5: memref<1x96xf32, #tpu.memory_space<vmem>>, %arg6: memref<1x96xf32, #tpu.memory_space<vmem>>, %arg7: memref<2x32xf32, #tpu.memory_space<vmem>>) attributes {dimension_semantics = [#tpu.dimension_semantics<arbitrary>], iteration_bounds = array<i64: 1>, scalar_prefetch = 0 : i64, scratch_operands = 0 : i64, tpu.core_type = #tpu.core_type<tc>, window_params = [{pipeline_mode = #tpu.pipeline_mode<synchronous>, transform_indices = @transform_0, window_bounds = array<i64: 16, 1>}, {pipeline_mode = #tpu.pipeline_mode<synchronous>, transform_indices = @transform_1, window_bounds = array<i64: 21, 32>}, {pipeline_mode = #tpu.pipeline_mode<synchronous>, transform_indices = @transform_2, window_bounds = array<i64: 32, 96>}, {pipeline_mode = #tpu.pipeline_mode<synchronous>, transform_indices = @transform_3, window_bounds = array<i64: 32, 96>}, {pipeline_mode = #tpu.pipeline_mode<synchronous>, transform_indices = @transform_4, window_bounds = array<i64: 1, 96>}, {pipeline_mode = #tpu.pipeline_mode<synchronous>, transform_indices = @transform_5, window_bounds = array<i64: 1, 96>}, {pipeline_mode = #tpu.pipeline_mode<synchronous>, transform_indices = @transform_6, window_bounds = array<i64: 2, 32>}]} {
    %c0 = arith.constant 0 : index
    %c0_0 = arith.constant 0 : index
    %0 = vector.load %arg1[%c0, %c0_0] : memref<16x1xi32, #tpu.memory_space<vmem>>, vector<16x1xi32>
    %1 = tpu.iota {dimensions = array<i32: 1>} : vector<16x21xi32>
    %2 = vector.broadcast %0 : vector<16x1xi32> to vector<16x21xi32>
    %3 = arith.cmpi eq, %1, %2 : vector<16x21xi32>
    %4 = arith.extui %3 : vector<16x21xi1> to vector<16x21xi32>
    %5 = arith.sitofp %4 : vector<16x21xi32> to vector<16x21xf32>
    %c0_1 = arith.constant 0 : index
    %c0_2 = arith.constant 0 : index
    %6 = vector.load %arg2[%c0_1, %c0_2] : memref<21x32xf32, #tpu.memory_space<vmem>>, vector<21x32xf32>
    %cst = arith.constant dense<0.000000e+00> : vector<16x32xf32>
    %7 = tpu.matmul %5, %6, %cst {dimension_numbers = #tpu.dot_dimension_numbers<[1], [0], [0], [1], [0, 0, 1, 1], [], []>} : vector<16x21xf32>, vector<21x32xf32>, vector<16x32xf32> -> vector<16x32xf32>
    %c0_3 = arith.constant 0 : index
    %c0_4 = arith.constant 0 : index
    %8 = vector.load %arg3[%c0_3, %c0_4] : memref<32x96xf32, #tpu.memory_space<vmem>>, vector<32x96xf32>
    %cst_5 = arith.constant dense<0.000000e+00> : vector<16x96xf32>
    %9 = tpu.matmul %7, %8, %cst_5 {dimension_numbers = #tpu.dot_dimension_numbers<[1], [0], [0], [1], [0, 0, 1, 1], [], []>} : vector<16x32xf32>, vector<32x96xf32>, vector<16x96xf32> -> vector<16x96xf32>
    %c0_6 = arith.constant 0 : index
    %c0_7 = arith.constant 0 : index
    %10 = vector.load %arg5[%c0_6, %c0_7] : memref<1x96xf32, #tpu.memory_space<vmem>>, vector<1x96xf32>
    %11 = vector.broadcast %10 : vector<1x96xf32> to vector<16x96xf32>
    %12 = arith.addf %9, %11 : vector<16x96xf32>
    %c0_8 = arith.constant 0 : index
    %c0_9 = arith.constant 0 : index
    %13 = vector.load %arg4[%c0_8, %c0_9] : memref<32x96xf32, #tpu.memory_space<vmem>>, vector<32x96xf32>
    %c0_10 = arith.constant 0 : index
    %c0_11 = arith.constant 0 : index
    %14 = vector.load %arg6[%c0_10, %c0_11] : memref<1x96xf32, #tpu.memory_space<vmem>>, vector<1x96xf32>
    %cst_12 = arith.constant 0.000000e+00 : f32
    %15 = vector.broadcast %cst_12 : f32 to vector<2x32xf32>
    %16 = vector.extract_strided_slice %12 {offsets = [0, 0], sizes = [2, 96], strides = [1, 1]} : vector<16x96xf32> to vector<2x96xf32>
    %cst_13 = arith.constant dense<0.000000e+00> : vector<2x96xf32>
    %17 = tpu.matmul %15, %13, %cst_13 {dimension_numbers = #tpu.dot_dimension_numbers<[1], [0], [0], [1], [0, 0, 1, 1], [], []>} : vector<2x32xf32>, vector<32x96xf32>, vector<2x96xf32> -> vector<2x96xf32>
    %18 = vector.broadcast %14 : vector<1x96xf32> to vector<2x96xf32>
    %19 = arith.addf %17, %18 : vector<2x96xf32>
    %20 = arith.addf %16, %19 : vector<2x96xf32>
    %21 = arith.negf %20 : vector<2x96xf32>
    %22 = math.exp %21 : vector<2x96xf32>
    %cst_14 = arith.constant 1.000000e+00 : f32
    %23 = vector.broadcast %cst_14 : f32 to vector<2x96xf32>
    %24 = arith.addf %23, %22 : vector<2x96xf32>
    %25 = arith.divf %23, %24 : vector<2x96xf32>
    %26 = vector.extract_strided_slice %25 {offsets = [0, 0], sizes = [2, 32], strides = [1, 1]} : vector<2x96xf32> to vector<2x32xf32>
    %27 = vector.extract_strided_slice %25 {offsets = [0, 32], sizes = [2, 32], strides = [1, 1]} : vector<2x96xf32> to vector<2x32xf32>
    %28 = vector.extract_strided_slice %16 {offsets = [0, 64], sizes = [2, 32], strides = [1, 1]} : vector<2x96xf32> to vector<2x32xf32>
    %29 = vector.extract_strided_slice %19 {offsets = [0, 64], sizes = [2, 32], strides = [1, 1]} : vector<2x96xf32> to vector<2x32xf32>
    %30 = arith.mulf %26, %29 : vector<2x32xf32>
    %31 = arith.addf %28, %30 : vector<2x32xf32>
    %32 = math.tanh %31 : vector<2x32xf32>
    %cst_15 = arith.constant 1.000000e+00 : f32
    %33 = vector.broadcast %cst_15 : f32 to vector<2x32xf32>
    %34 = arith.subf %33, %27 : vector<2x32xf32>
    %35 = arith.mulf %34, %32 : vector<2x32xf32>
    %36 = arith.mulf %27, %15 : vector<2x32xf32>
    %37 = arith.addf %35, %36 : vector<2x32xf32>
    %38 = vector.extract_strided_slice %12 {offsets = [2, 0], sizes = [2, 96], strides = [1, 1]} : vector<16x96xf32> to vector<2x96xf32>
    %cst_16 = arith.constant dense<0.000000e+00> : vector<2x96xf32>
    %39 = tpu.matmul %37, %13, %cst_16 {dimension_numbers = #tpu.dot_dimension_numbers<[1], [0], [0], [1], [0, 0, 1, 1], [], []>} : vector<2x32xf32>, vector<32x96xf32>, vector<2x96xf32> -> vector<2x96xf32>
    %40 = vector.broadcast %14 : vector<1x96xf32> to vector<2x96xf32>
    %41 = arith.addf %39, %40 : vector<2x96xf32>
    %42 = arith.addf %38, %41 : vector<2x96xf32>
    %43 = arith.negf %42 : vector<2x96xf32>
    %44 = math.exp %43 : vector<2x96xf32>
    %cst_17 = arith.constant 1.000000e+00 : f32
    %45 = vector.broadcast %cst_17 : f32 to vector<2x96xf32>
    %46 = arith.addf %45, %44 : vector<2x96xf32>
    %47 = arith.divf %45, %46 : vector<2x96xf32>
    %48 = vector.extract_strided_slice %47 {offsets = [0, 0], sizes = [2, 32], strides = [1, 1]} : vector<2x96xf32> to vector<2x32xf32>
    %49 = vector.extract_strided_slice %47 {offsets = [0, 32], sizes = [2, 32], strides = [1, 1]} : vector<2x96xf32> to vector<2x32xf32>
    %50 = vector.extract_strided_slice %38 {offsets = [0, 64], sizes = [2, 32], strides = [1, 1]} : vector<2x96xf32> to vector<2x32xf32>
    %51 = vector.extract_strided_slice %41 {offsets = [0, 64], sizes = [2, 32], strides = [1, 1]} : vector<2x96xf32> to vector<2x32xf32>
    %52 = arith.mulf %48, %51 : vector<2x32xf32>
    %53 = arith.addf %50, %52 : vector<2x32xf32>
    %54 = math.tanh %53 : vector<2x32xf32>
    %cst_18 = arith.constant 1.000000e+00 : f32
    %55 = vector.broadcast %cst_18 : f32 to vector<2x32xf32>
    %56 = arith.subf %55, %49 : vector<2x32xf32>
    %57 = arith.mulf %56, %54 : vector<2x32xf32>
    %58 = arith.mulf %49, %37 : vector<2x32xf32>
    %59 = arith.addf %57, %58 : vector<2x32xf32>
    %60 = vector.extract_strided_slice %12 {offsets = [4, 0], sizes = [2, 96], strides = [1, 1]} : vector<16x96xf32> to vector<2x96xf32>
    %cst_19 = arith.constant dense<0.000000e+00> : vector<2x96xf32>
    %61 = tpu.matmul %59, %13, %cst_19 {dimension_numbers = #tpu.dot_dimension_numbers<[1], [0], [0], [1], [0, 0, 1, 1], [], []>} : vector<2x32xf32>, vector<32x96xf32>, vector<2x96xf32> -> vector<2x96xf32>
    %62 = vector.broadcast %14 : vector<1x96xf32> to vector<2x96xf32>
    %63 = arith.addf %61, %62 : vector<2x96xf32>
    %64 = arith.addf %60, %63 : vector<2x96xf32>
    %65 = arith.negf %64 : vector<2x96xf32>
    %66 = math.exp %65 : vector<2x96xf32>
    %cst_20 = arith.constant 1.000000e+00 : f32
    %67 = vector.broadcast %cst_20 : f32 to vector<2x96xf32>
    %68 = arith.addf %67, %66 : vector<2x96xf32>
    %69 = arith.divf %67, %68 : vector<2x96xf32>
    %70 = vector.extract_strided_slice %69 {offsets = [0, 0], sizes = [2, 32], strides = [1, 1]} : vector<2x96xf32> to vector<2x32xf32>
    %71 = vector.extract_strided_slice %69 {offsets = [0, 32], sizes = [2, 32], strides = [1, 1]} : vector<2x96xf32> to vector<2x32xf32>
    %72 = vector.extract_strided_slice %60 {offsets = [0, 64], sizes = [2, 32], strides = [1, 1]} : vector<2x96xf32> to vector<2x32xf32>
    %73 = vector.extract_strided_slice %63 {offsets = [0, 64], sizes = [2, 32], strides = [1, 1]} : vector<2x96xf32> to vector<2x32xf32>
    %74 = arith.mulf %70, %73 : vector<2x32xf32>
    %75 = arith.addf %72, %74 : vector<2x32xf32>
    %76 = math.tanh %75 : vector<2x32xf32>
    %cst_21 = arith.constant 1.000000e+00 : f32
    %77 = vector.broadcast %cst_21 : f32 to vector<2x32xf32>
    %78 = arith.subf %77, %71 : vector<2x32xf32>
    %79 = arith.mulf %78, %76 : vector<2x32xf32>
    %80 = arith.mulf %71, %59 : vector<2x32xf32>
    %81 = arith.addf %79, %80 : vector<2x32xf32>
    %82 = vector.extract_strided_slice %12 {offsets = [6, 0], sizes = [2, 96], strides = [1, 1]} : vector<16x96xf32> to vector<2x96xf32>
    %cst_22 = arith.constant dense<0.000000e+00> : vector<2x96xf32>
    %83 = tpu.matmul %81, %13, %cst_22 {dimension_numbers = #tpu.dot_dimension_numbers<[1], [0], [0], [1], [0, 0, 1, 1], [], []>} : vector<2x32xf32>, vector<32x96xf32>, vector<2x96xf32> -> vector<2x96xf32>
    %84 = vector.broadcast %14 : vector<1x96xf32> to vector<2x96xf32>
    %85 = arith.addf %83, %84 : vector<2x96xf32>
    %86 = arith.addf %82, %85 : vector<2x96xf32>
    %87 = arith.negf %86 : vector<2x96xf32>
    %88 = math.exp %87 : vector<2x96xf32>
    %cst_23 = arith.constant 1.000000e+00 : f32
    %89 = vector.broadcast %cst_23 : f32 to vector<2x96xf32>
    %90 = arith.addf %89, %88 : vector<2x96xf32>
    %91 = arith.divf %89, %90 : vector<2x96xf32>
    %92 = vector.extract_strided_slice %91 {offsets = [0, 0], sizes = [2, 32], strides = [1, 1]} : vector<2x96xf32> to vector<2x32xf32>
    %93 = vector.extract_strided_slice %91 {offsets = [0, 32], sizes = [2, 32], strides = [1, 1]} : vector<2x96xf32> to vector<2x32xf32>
    %94 = vector.extract_strided_slice %82 {offsets = [0, 64], sizes = [2, 32], strides = [1, 1]} : vector<2x96xf32> to vector<2x32xf32>
    %95 = vector.extract_strided_slice %85 {offsets = [0, 64], sizes = [2, 32], strides = [1, 1]} : vector<2x96xf32> to vector<2x32xf32>
    %96 = arith.mulf %92, %95 : vector<2x32xf32>
    %97 = arith.addf %94, %96 : vector<2x32xf32>
    %98 = math.tanh %97 : vector<2x32xf32>
    %cst_24 = arith.constant 1.000000e+00 : f32
    %99 = vector.broadcast %cst_24 : f32 to vector<2x32xf32>
    %100 = arith.subf %99, %93 : vector<2x32xf32>
    %101 = arith.mulf %100, %98 : vector<2x32xf32>
    %102 = arith.mulf %93, %81 : vector<2x32xf32>
    %103 = arith.addf %101, %102 : vector<2x32xf32>
    %104 = vector.extract_strided_slice %12 {offsets = [8, 0], sizes = [2, 96], strides = [1, 1]} : vector<16x96xf32> to vector<2x96xf32>
    %cst_25 = arith.constant dense<0.000000e+00> : vector<2x96xf32>
    %105 = tpu.matmul %103, %13, %cst_25 {dimension_numbers = #tpu.dot_dimension_numbers<[1], [0], [0], [1], [0, 0, 1, 1], [], []>} : vector<2x32xf32>, vector<32x96xf32>, vector<2x96xf32> -> vector<2x96xf32>
    %106 = vector.broadcast %14 : vector<1x96xf32> to vector<2x96xf32>
    %107 = arith.addf %105, %106 : vector<2x96xf32>
    %108 = arith.addf %104, %107 : vector<2x96xf32>
    %109 = arith.negf %108 : vector<2x96xf32>
    %110 = math.exp %109 : vector<2x96xf32>
    %cst_26 = arith.constant 1.000000e+00 : f32
    %111 = vector.broadcast %cst_26 : f32 to vector<2x96xf32>
    %112 = arith.addf %111, %110 : vector<2x96xf32>
    %113 = arith.divf %111, %112 : vector<2x96xf32>
    %114 = vector.extract_strided_slice %113 {offsets = [0, 0], sizes = [2, 32], strides = [1, 1]} : vector<2x96xf32> to vector<2x32xf32>
    %115 = vector.extract_strided_slice %113 {offsets = [0, 32], sizes = [2, 32], strides = [1, 1]} : vector<2x96xf32> to vector<2x32xf32>
    %116 = vector.extract_strided_slice %104 {offsets = [0, 64], sizes = [2, 32], strides = [1, 1]} : vector<2x96xf32> to vector<2x32xf32>
    %117 = vector.extract_strided_slice %107 {offsets = [0, 64], sizes = [2, 32], strides = [1, 1]} : vector<2x96xf32> to vector<2x32xf32>
    %118 = arith.mulf %114, %117 : vector<2x32xf32>
    %119 = arith.addf %116, %118 : vector<2x32xf32>
    %120 = math.tanh %119 : vector<2x32xf32>
    %cst_27 = arith.constant 1.000000e+00 : f32
    %121 = vector.broadcast %cst_27 : f32 to vector<2x32xf32>
    %122 = arith.subf %121, %115 : vector<2x32xf32>
    %123 = arith.mulf %122, %120 : vector<2x32xf32>
    %124 = arith.mulf %115, %103 : vector<2x32xf32>
    %125 = arith.addf %123, %124 : vector<2x32xf32>
    %126 = vector.extract_strided_slice %12 {offsets = [10, 0], sizes = [2, 96], strides = [1, 1]} : vector<16x96xf32> to vector<2x96xf32>
    %cst_28 = arith.constant dense<0.000000e+00> : vector<2x96xf32>
    %127 = tpu.matmul %125, %13, %cst_28 {dimension_numbers = #tpu.dot_dimension_numbers<[1], [0], [0], [1], [0, 0, 1, 1], [], []>} : vector<2x32xf32>, vector<32x96xf32>, vector<2x96xf32> -> vector<2x96xf32>
    %128 = vector.broadcast %14 : vector<1x96xf32> to vector<2x96xf32>
    %129 = arith.addf %127, %128 : vector<2x96xf32>
    %130 = arith.addf %126, %129 : vector<2x96xf32>
    %131 = arith.negf %130 : vector<2x96xf32>
    %132 = math.exp %131 : vector<2x96xf32>
    %cst_29 = arith.constant 1.000000e+00 : f32
    %133 = vector.broadcast %cst_29 : f32 to vector<2x96xf32>
    %134 = arith.addf %133, %132 : vector<2x96xf32>
    %135 = arith.divf %133, %134 : vector<2x96xf32>
    %136 = vector.extract_strided_slice %135 {offsets = [0, 0], sizes = [2, 32], strides = [1, 1]} : vector<2x96xf32> to vector<2x32xf32>
    %137 = vector.extract_strided_slice %135 {offsets = [0, 32], sizes = [2, 32], strides = [1, 1]} : vector<2x96xf32> to vector<2x32xf32>
    %138 = vector.extract_strided_slice %126 {offsets = [0, 64], sizes = [2, 32], strides = [1, 1]} : vector<2x96xf32> to vector<2x32xf32>
    %139 = vector.extract_strided_slice %129 {offsets = [0, 64], sizes = [2, 32], strides = [1, 1]} : vector<2x96xf32> to vector<2x32xf32>
    %140 = arith.mulf %136, %139 : vector<2x32xf32>
    %141 = arith.addf %138, %140 : vector<2x32xf32>
    %142 = math.tanh %141 : vector<2x32xf32>
    %cst_30 = arith.constant 1.000000e+00 : f32
    %143 = vector.broadcast %cst_30 : f32 to vector<2x32xf32>
    %144 = arith.subf %143, %137 : vector<2x32xf32>
    %145 = arith.mulf %144, %142 : vector<2x32xf32>
    %146 = arith.mulf %137, %125 : vector<2x32xf32>
    %147 = arith.addf %145, %146 : vector<2x32xf32>
    %148 = vector.extract_strided_slice %12 {offsets = [12, 0], sizes = [2, 96], strides = [1, 1]} : vector<16x96xf32> to vector<2x96xf32>
    %cst_31 = arith.constant dense<0.000000e+00> : vector<2x96xf32>
    %149 = tpu.matmul %147, %13, %cst_31 {dimension_numbers = #tpu.dot_dimension_numbers<[1], [0], [0], [1], [0, 0, 1, 1], [], []>} : vector<2x32xf32>, vector<32x96xf32>, vector<2x96xf32> -> vector<2x96xf32>
    %150 = vector.broadcast %14 : vector<1x96xf32> to vector<2x96xf32>
    %151 = arith.addf %149, %150 : vector<2x96xf32>
    %152 = arith.addf %148, %151 : vector<2x96xf32>
    %153 = arith.negf %152 : vector<2x96xf32>
    %154 = math.exp %153 : vector<2x96xf32>
    %cst_32 = arith.constant 1.000000e+00 : f32
    %155 = vector.broadcast %cst_32 : f32 to vector<2x96xf32>
    %156 = arith.addf %155, %154 : vector<2x96xf32>
    %157 = arith.divf %155, %156 : vector<2x96xf32>
    %158 = vector.extract_strided_slice %157 {offsets = [0, 0], sizes = [2, 32], strides = [1, 1]} : vector<2x96xf32> to vector<2x32xf32>
    %159 = vector.extract_strided_slice %157 {offsets = [0, 32], sizes = [2, 32], strides = [1, 1]} : vector<2x96xf32> to vector<2x32xf32>
    %160 = vector.extract_strided_slice %148 {offsets = [0, 64], sizes = [2, 32], strides = [1, 1]} : vector<2x96xf32> to vector<2x32xf32>
    %161 = vector.extract_strided_slice %151 {offsets = [0, 64], sizes = [2, 32], strides = [1, 1]} : vector<2x96xf32> to vector<2x32xf32>
    %162 = arith.mulf %158, %161 : vector<2x32xf32>
    %163 = arith.addf %160, %162 : vector<2x32xf32>
    %164 = math.tanh %163 : vector<2x32xf32>
    %cst_33 = arith.constant 1.000000e+00 : f32
    %165 = vector.broadcast %cst_33 : f32 to vector<2x32xf32>
    %166 = arith.subf %165, %159 : vector<2x32xf32>
    %167 = arith.mulf %166, %164 : vector<2x32xf32>
    %168 = arith.mulf %159, %147 : vector<2x32xf32>
    %169 = arith.addf %167, %168 : vector<2x32xf32>
    %170 = vector.extract_strided_slice %12 {offsets = [14, 0], sizes = [2, 96], strides = [1, 1]} : vector<16x96xf32> to vector<2x96xf32>
    %cst_34 = arith.constant dense<0.000000e+00> : vector<2x96xf32>
    %171 = tpu.matmul %169, %13, %cst_34 {dimension_numbers = #tpu.dot_dimension_numbers<[1], [0], [0], [1], [0, 0, 1, 1], [], []>} : vector<2x32xf32>, vector<32x96xf32>, vector<2x96xf32> -> vector<2x96xf32>
    %172 = vector.broadcast %14 : vector<1x96xf32> to vector<2x96xf32>
    %173 = arith.addf %171, %172 : vector<2x96xf32>
    %174 = arith.addf %170, %173 : vector<2x96xf32>
    %175 = arith.negf %174 : vector<2x96xf32>
    %176 = math.exp %175 : vector<2x96xf32>
    %cst_35 = arith.constant 1.000000e+00 : f32
    %177 = vector.broadcast %cst_35 : f32 to vector<2x96xf32>
    %178 = arith.addf %177, %176 : vector<2x96xf32>
    %179 = arith.divf %177, %178 : vector<2x96xf32>
    %180 = vector.extract_strided_slice %179 {offsets = [0, 0], sizes = [2, 32], strides = [1, 1]} : vector<2x96xf32> to vector<2x32xf32>
    %181 = vector.extract_strided_slice %179 {offsets = [0, 32], sizes = [2, 32], strides = [1, 1]} : vector<2x96xf32> to vector<2x32xf32>
    %182 = vector.extract_strided_slice %170 {offsets = [0, 64], sizes = [2, 32], strides = [1, 1]} : vector<2x96xf32> to vector<2x32xf32>
    %183 = vector.extract_strided_slice %173 {offsets = [0, 64], sizes = [2, 32], strides = [1, 1]} : vector<2x96xf32> to vector<2x32xf32>
    %184 = arith.mulf %180, %183 : vector<2x32xf32>
    %185 = arith.addf %182, %184 : vector<2x32xf32>
    %186 = math.tanh %185 : vector<2x32xf32>
    %cst_36 = arith.constant 1.000000e+00 : f32
    %187 = vector.broadcast %cst_36 : f32 to vector<2x32xf32>
    %188 = arith.subf %187, %181 : vector<2x32xf32>
    %189 = arith.mulf %188, %186 : vector<2x32xf32>
    %190 = arith.mulf %181, %169 : vector<2x32xf32>
    %191 = arith.addf %189, %190 : vector<2x32xf32>
    %c0_37 = arith.constant 0 : index
    %c0_38 = arith.constant 0 : index
    %192 = vector.load %arg7[%c0_37, %c0_38] : memref<2x32xf32, #tpu.memory_space<vmem>>, vector<2x32xf32>
    tpu.vector_store %arg7[%c0_37, %c0_38], %191 {strides = array<i32>} : memref<2x32xf32, #tpu.memory_space<vmem>>, vector<2x32xf32>,
    return
  }
  func.func @transform_0(%arg0: i32) -> (i32, i32) {
    %c0_i32 = arith.constant 0 : i32
    %c0_i32_0 = arith.constant 0 : i32
    %c0_i32_1 = arith.constant 0 : i32
    return %c0_i32, %c0_i32_0 : i32, i32
  }
  func.func @transform_1(%arg0: i32) -> (i32, i32) {
    %c0_i32 = arith.constant 0 : i32
    %c0_i32_0 = arith.constant 0 : i32
    %c0_i32_1 = arith.constant 0 : i32
    return %c0_i32, %c0_i32_0 : i32, i32
  }
  func.func @transform_2(%arg0: i32) -> (i32, i32) {
    %c0_i32 = arith.constant 0 : i32
    %c0_i32_0 = arith.constant 0 : i32
    %c0_i32_1 = arith.constant 0 : i32
    return %c0_i32, %c0_i32_0 : i32, i32
  }
  func.func @transform_3(%arg0: i32) -> (i32, i32) {
    %c0_i32 = arith.constant 0 : i32
    %c0_i32_0 = arith.constant 0 : i32
    %c0_i32_1 = arith.constant 0 : i32
    return %c0_i32, %c0_i32_0 : i32, i32
  }
  func.func @transform_4(%arg0: i32) -> (i32, i32) {
    %c0_i32 = arith.constant 0 : i32
    %c0_i32_0 = arith.constant 0 : i32
    %c0_i32_1 = arith.constant 0 : i32
    return %c0_i32, %c0_i32_0 : i32, i32
  }
  func.func @transform_5(%arg0: i32) -> (i32, i32) {
    %c0_i32 = arith.constant 0 : i32
    %c0_i32_0 = arith.constant 0 : i32
    %c0_i32_1 = arith.constant 0 : i32
    return %c0_i32, %c0_i32_0 : i32, i32
  }
  func.func @transform_6(%arg0: i32) -> (i32, i32) {
    %c0_i32 = arith.constant 0 : i32
    %c0_i32_0 = arith.constant 0 : i32
    %c0_i32_1 = arith.constant 0 : i32
    return %c0_i32, %c0_i32_0 : i32, i32
  }
}

</mosaic_0001>

<llo_original>
// kernel: tpu_custom_call.1
$region0: #{tpu_custom_call.1}
  #allocation0 [shape = 'u32[]', space=smem, size = 0x4, offset = 0x4, fixed_abs, tag = 'smem constant byte address 0x4 - core index']
  #allocation1 [shape = 'u32[144,128]{1,0:T(1,128)}', space=vmem, size = 0x12000, scoped, tag = 'internal scratch']
  %s0 = inlined_call_operand.vmem [shape: s32[16,1], index: 0, kind: input, shape index: {}]
  %s1 = inlined_call_operand.hbm [shape: f32[21,32], index: 1, kind: input, shape index: {}]
  %s2 = inlined_call_operand.hbm [shape: f32[32,96], index: 2, kind: input, shape index: {}]
  %s3 = inlined_call_operand.hbm [shape: f32[32,96], index: 3, kind: input, shape index: {}]
  %s4 = inlined_call_operand.vmem [shape: f32[1,96], index: 4, kind: input, shape index: {}]
  %s5 = inlined_call_operand.vmem [shape: f32[1,96], index: 5, kind: input, shape index: {}]
  %s6 = inlined_call_operand.hbm [shape: f32[2,32], index: 6, kind: output, shape index: {}]
  %s7 = sld [smem:[#allocation0]]
  $region46: #{tpu_custom_call.1} parent=0
    _
  %s9 = ssub.s32 1, %s7
  %s10 = scalar_select 0, %s9, %s7
  $region1: #{tpu_custom_call.1} parent=0
    #allocation2 [shape = 'u8[12288]{0}', space=vmem, size = 0x3000, scoped, tag = 'input window, operand 1, single buffered']
    #allocation3 [shape = 's32[1]{0}', space=sflag, size = 0x4, scoped, tag = 'scoped memory for tpu_custom_call.1']
    #allocation4 [shape = 's32[1]{0}', space=sflag, size = 0x4, scoped, tag = 'scoped memory for tpu_custom_call.1']
    #allocation5 [shape = 'u8[16384]{0}', space=vmem, size = 0x4000, scoped, tag = 'input window, operand 2, single buffered']
    #allocation6 [shape = 's32[1]{0}', space=sflag, size = 0x4, scoped, tag = 'scoped memory for tpu_custom_call.1']
    #allocation7 [shape = 'u8[16384]{0}', space=vmem, size = 0x4000, scoped, tag = 'input window, operand 3, single buffered']
    #allocation8 [shape = 'u8[1024]{0}', space=vmem, size = 0x400, scoped, tag = 'output window, operand 0, single buffered']
    %11 = vsyncpa [#allocation3], 0
    %12 = vsyncpa [#allocation6], 0
    %13 = vsyncpa [#allocation4], 0
    // Predicated region
    $region2: #{tpu_custom_call.1} parent=1 // pred_check
      _
    $region3: #{tpu_custom_call.1} parent=1 // pred_check_branch
      %15 = sbr.rel (0) target = $region5
    $region4: #{tpu_custom_call.1} parent=1 // pred_region
      _
    $region5: #{tpu_custom_call.1} parent=1 // pred_fallthru
      _
    // Predicated region
    $region6: #{tpu_custom_call.1} parent=1 // pred_check
      _
    $region7: #{tpu_custom_call.1} parent=1 // pred_check_branch
      %17 = sbr.rel (0) target = $region9
    $region8: #{tpu_custom_call.1} parent=1 // pred_region
      %s19 = ssub.s32 384, 384
      %20 = vsyncadd [#allocation3], %s19
      %s21 = sshll.u32 [#allocation2], 4
      %s22 = int_to_ptr.vmem [resolvable:$true] %s21
      %27 = dma.hbm_to_vmem [thread:$0]  %s1, 384, %s22, [#allocation3], 128, 128, 8
    $region9: #{tpu_custom_call.1} parent=1 // pred_fallthru
      _
    // Predicated region
    $region10: #{tpu_custom_call.1} parent=1 // pred_check
      _
    $region11: #{tpu_custom_call.1} parent=1 // pred_check_branch
      %29 = sbr.rel (0) target = $region13
    $region12: #{tpu_custom_call.1} parent=1 // pred_region
      %s31 = ssub.s32 512, 512
      %32 = vsyncadd [#allocation6], %s31
      %s33 = sshll.u32 [#allocation5], 4
      %s34 = int_to_ptr.vmem [resolvable:$true] %s33
      %39 = dma.hbm_to_vmem [thread:$0]  %s2, 512, %s34, [#allocation6], 128, 128, 8
    $region13: #{tpu_custom_call.1} parent=1 // pred_fallthru
      _
    // Predicated region
    $region14: #{tpu_custom_call.1} parent=1 // pred_check
      _
    $region15: #{tpu_custom_call.1} parent=1 // pred_check_branch
      %41 = sbr.rel (0) target = $region17
    $region16: #{tpu_custom_call.1} parent=1 // pred_region
      %s43 = ssub.s32 512, 512
      %44 = vsyncadd [#allocation6], %s43
      %s45 = sshll.u32 [#allocation7], 4
      %s46 = int_to_ptr.vmem [resolvable:$true] %s45
      %51 = dma.hbm_to_vmem [thread:$0]  %s3, 512, %s46, [#allocation6], 128, 128, 8
    $region17: #{tpu_custom_call.1} parent=1 // pred_fallthru
      _
    // Predicated region
    $region18: #{tpu_custom_call.1} parent=1 // pred_check
      _
    $region19: #{tpu_custom_call.1} parent=1 // pred_check_branch
      %53 = sbr.rel (0) target = $region21
    $region20: #{tpu_custom_call.1} parent=1 // pred_region
      _
    $region21: #{tpu_custom_call.1} parent=1 // pred_fallthru
      _
    // Predicated region
    $region22: #{tpu_custom_call.1} parent=1 // pred_check
      _
    $region23: #{tpu_custom_call.1} parent=1 // pred_check_branch
      %55 = sbr.rel (0) target = $region25
    $region24: #{tpu_custom_call.1} parent=1 // pred_region
      _
    $region25: #{tpu_custom_call.1} parent=1 // pred_fallthru
      _
    // Predicated region
    $region26: #{tpu_custom_call.1} parent=1 // pred_check
      _
    $region27: #{tpu_custom_call.1} parent=1 // pred_check_branch
      %57 = sbr.rel (0) target = $region29
    $region28: #{tpu_custom_call.1} parent=1 // pred_region
      %58 = dma.done [#allocation3], 384
    $region29: #{tpu_custom_call.1} parent=1 // pred_fallthru
      _
    // Predicated region
    $region30: #{tpu_custom_call.1} parent=1 // pred_check
      _
    $region31: #{tpu_custom_call.1} parent=1 // pred_check_branch
      %60 = sbr.rel (0) target = $region33
    $region32: #{tpu_custom_call.1} parent=1 // pred_region
      %61 = dma.done [#allocation6], 512
    $region33: #{tpu_custom_call.1} parent=1 // pred_fallthru
      _
    // Predicated region
    $region34: #{tpu_custom_call.1} parent=1 // pred_check
      _
    $region35: #{tpu_custom_call.1} parent=1 // pred_check_branch
      %63 = sbr.rel (0) target = $region37
    $region36: #{tpu_custom_call.1} parent=1 // pred_region
      %64 = dma.done [#allocation6], 512
    $region37: #{tpu_custom_call.1} parent=1 // pred_fallthru
      _
    %v65 = vld [vmem:[%s0] sm:$0xff]
    %v66 = vld [vmem:[%s0 + $0x8] sm:$0xff]
    %v67 = vlaneseq
    %v68 = vand.u32 %v67, 127
    %69 = vset.pattern.permute.xlu0 0
    %70 = vperm.xlu0 %69, %v65
    %v71 = vpop.permute.xlu0 %70
    %72 = vset.pattern.permute.xlu0 0
    %73 = vperm.xlu0 %72, %v66
    %v74 = vpop.permute.xlu0 %73
    %vm75 = vcmp.eq.s32.totalorder %v68, %v71
    %vm76 = vcmp.eq.s32.totalorder %v68, %v74
    %v77 = vsel %vm75, 1, 0
    %v78 = vsel %vm76, 1, 0
    %v79 = vcvt.s32.f32 %v77
    %v80 = vcvt.s32.f32 %v78
    %v81 = vld [vmem:[#allocation2] sm:$0xff]
    %v82 = vld [vmem:[#allocation2 + $0x8] sm:$0xff]
    %v83 = vld [vmem:[#allocation2 + $0x10] sm:$0x1f]
    %vm84 = vcmask 171008
    %v86 = vsel %vm84, %v79, 0
    %v89 = vsel %vm84, %v80, 0
    %vm91 = vcmask 1044480
    %v93 = vsel %vm91, %v83, 0
    %95 = vmatprep.subr.mxu0 0.0
    %96 = vmatpush1.msra.mxu0 %v81
    %97 = vmatprep.subr.mxu0 0.0
    %98 = vmatpush1.msra.mxu0 %v82
    %99 = vmatprep.subr.mxu0 0.0
    %100 = vmatpush1.msra.mxu0 %v93
    %101 = vmatprep.subr.mxu0 0.0
    %102 = vmatpush1.msra.mxu0 0.0
    %103 = vmatprep.subr.mxu0 0.0
    %104 = vmatpush1.msra.mxu0 0.0
    %105 = vmatprep.subr.mxu0 0.0
    %106 = vmatpush1.msra.mxu0 0.0
    %107 = vmatprep.subr.mxu0 0.0
    %108 = vmatpush1.msra.mxu0 0.0
    %109 = vmatprep.subr.mxu0 0.0
    %110 = vmatpush1.msra.mxu0 0.0
    %111 = vmatprep.subr.mxu0 0.0
    %112 = vmatpush1.msra.mxu0 0.0
    %113 = vmatprep.subr.mxu0 0.0
    %114 = vmatpush1.msra.mxu0 0.0
    %115 = vmatprep.subr.mxu0 0.0
    %116 = vmatpush1.msra.mxu0 0.0
    %117 = vmatprep.subr.mxu0 0.0
    %118 = vmatpush1.msra.mxu0 0.0
    %119 = vmatprep.subr.mxu0 0.0
    %120 = vmatpush1.msra.mxu0 0.0
    %121 = vmatprep.subr.mxu0 0.0
    %122 = vmatpush1.msra.mxu0 0.0
    %123 = vmatprep.subr.mxu0 0.0
    %124 = vmatpush1.msra.mxu0 0.0
    %125 = vmatprep.subr.mxu0 0.0
    %126 = vmatpush1.msra.mxu0 0.0
    %127 = vmatprep.subr.mxu0 0.0
    %128 = vmatpush1.msra.mxu0 0.0
    %129 = vmatprep.subr.mxu0 0.0
    %130 = vmatpush1.msra.mxu0 0.0
    %131 = vmatprep.subr.mxu0 0.0
    %132 = vmatpush1.msra.mxu0 0.0
    %133 = vmatprep.subr.mxu0 0.0
    %134 = vmatpush1.msra.mxu0 0.0
    %135 = vmatprep.subr.mxu0 0.0
    %136 = vmatpush1.msra.mxu0 0.0
    %137 = vmatprep.subr.mxu0 0.0
    %138 = vmatpush1.msra.mxu0 0.0
    %139 = vmatprep.subr.mxu0 0.0
    %140 = vmatpush1.msra.mxu0 0.0
    %141 = vmatprep.subr.mxu0 0.0
    %142 = vmatpush1.msra.mxu0 0.0
    %143 = vmatprep.subr.mxu0 0.0
    %144 = vmatpush1.msra.mxu0 0.0
    %145 = vmatprep.subr.mxu0 0.0
    %146 = vmatpush1.msra.mxu0 0.0
    %147 = vmatprep.subr.mxu0 0.0
    %148 = vmatpush1.msra.mxu0 0.0
    %149 = vmatprep.subr.mxu0 0.0
    %150 = vmatpush1.msra.mxu0 0.0
    %151 = vmatprep.subr.mxu0 0.0
    %152 = vmatpush1.msra.mxu0 0.0
    %153 = vmatprep.subr.mxu0 0.0
    %154 = vmatpush1.msra.mxu0 0.0
    %155 = vmatprep.subr.mxu0 0.0
    %156 = vmatpush1.msra.mxu0 0.0
    %157 = vmatprep.subr.mxu0 0.0
    %158 = vmatpush1.msra.mxu0 0.0
    %159 = vmatprep.mubr.f32.mxu0 0.0
    %160 = vmatmul.mubr.f32.gmra.mrb[0].mxu0 %v86
    %v161 = vpop.f32.mrb[0].mxu0
    %v162 = vadd.f32 0.0, %v161
    %v163 = vpop.f32.mrb[0].mxu0
    %164 = vmatprep.mubr.f32.mxu0 0.0
    %165 = vmatmul.mubr.f32.gmra.mrb[0].mxu0 %v89
    %v166 = vpop.f32.mrb[0].mxu0
    %v167 = vadd.f32 0.0, %v166
    %v168 = vpop.f32.mrb[0].mxu0
    %169 = vdwg.mxu0
    %v170 = vld [vmem:[#allocation5] sm:$0xff]
    %v171 = vld [vmem:[#allocation5 + $0x8] sm:$0xff]
    %v172 = vld [vmem:[#allocation5 + $0x10] sm:$0xff]
    %v173 = vld [vmem:[#allocation5 + $0x18] sm:$0xff]
    %v174 = vld [vmem:[%s4] sm:$0x1]
    %v176 = vlaneseq
    %v177 = vshrl.u32 %v176, 7
    %v178 = vsub.s32 0, %v177
    %v179 = vrot.slane %v174, %v178
    %vm181 = vcmask 261120
    %v183 = vsel %vm181, %v162, 0
    %v186 = vsel %vm181, %v167, 0
    %188 = vmatprep.subr.mxu0 0.0
    %189 = vmatpush1.msra.mxu0 %v170
    %190 = vmatprep.subr.mxu0 0.0
    %191 = vmatpush1.msra.mxu0 %v171
    %192 = vmatprep.subr.mxu0 0.0
    %193 = vmatpush1.msra.mxu0 %v172
    %194 = vmatprep.subr.mxu0 0.0
    %195 = vmatpush1.msra.mxu0 %v173
    %196 = vmatprep.subr.mxu0 0.0
    %197 = vmatpush1.msra.mxu0 0.0
    %198 = vmatprep.subr.mxu0 0.0
    %199 = vmatpush1.msra.mxu0 0.0
    %200 = vmatprep.subr.mxu0 0.0
    %201 = vmatpush1.msra.mxu0 0.0
    %202 = vmatprep.subr.mxu0 0.0
    %203 = vmatpush1.msra.mxu0 0.0
    %204 = vmatprep.subr.mxu0 0.0
    %205 = vmatpush1.msra.mxu0 0.0
    %206 = vmatprep.subr.mxu0 0.0
    %207 = vmatpush1.msra.mxu0 0.0
    %208 = vmatprep.subr.mxu0 0.0
    %209 = vmatpush1.msra.mxu0 0.0
    %210 = vmatprep.subr.mxu0 0.0
    %211 = vmatpush1.msra.mxu0 0.0
    %212 = vmatprep.subr.mxu0 0.0
    %213 = vmatpush1.msra.mxu0 0.0
    %214 = vmatprep.subr.mxu0 0.0
    %215 = vmatpush1.msra.mxu0 0.0
    %216 = vmatprep.subr.mxu0 0.0
    %217 = vmatpush1.msra.mxu0 0.0
    %218 = vmatprep.subr.mxu0 0.0
    %219 = vmatpush1.msra.mxu0 0.0
    %220 = vmatprep.subr.mxu0 0.0
    %221 = vmatpush1.msra.mxu0 0.0
    %222 = vmatprep.subr.mxu0 0.0
    %223 = vmatpush1.msra.mxu0 0.0
    %224 = vmatprep.subr.mxu0 0.0
    %225 = vmatpush1.msra.mxu0 0.0
    %226 = vmatprep.subr.mxu0 0.0
    %227 = vmatpush1.msra.mxu0 0.0
    %228 = vmatprep.subr.mxu0 0.0
    %229 = vmatpush1.msra.mxu0 0.0
    %230 = vmatprep.subr.mxu0 0.0
    %231 = vmatpush1.msra.mxu0 0.0
    %232 = vmatprep.subr.mxu0 0.0
    %233 = vmatpush1.msra.mxu0 0.0
    %234 = vmatprep.subr.mxu0 0.0
    %235 = vmatpush1.msra.mxu0 0.0
    %236 = vmatprep.subr.mxu0 0.0
    %237 = vmatpush1.msra.mxu0 0.0
    %238 = vmatprep.subr.mxu0 0.0
    %239 = vmatpush1.msra.mxu0 0.0
    %240 = vmatprep.subr.mxu0 0.0
    %241 = vmatpush1.msra.mxu0 0.0
    %242 = vmatprep.subr.mxu0 0.0
    %243 = vmatpush1.msra.mxu0 0.0
    %244 = vmatprep.subr.mxu0 0.0
    %245 = vmatpush1.msra.mxu0 0.0
    %246 = vmatprep.subr.mxu0 0.0
    %247 = vmatpush1.msra.mxu0 0.0
    %248 = vmatprep.subr.mxu0 0.0
    %249 = vmatpush1.msra.mxu0 0.0
    %250 = vmatprep.subr.mxu0 0.0
    %251 = vmatpush1.msra.mxu0 0.0
    %252 = vmatprep.mubr.f32.mxu0 0.0
    %253 = vmatmul.mubr.f32.gmra.mrb[0].mxu0 %v183
    %v254 = vpop.f32.mrb[0].mxu0
    %v255 = vadd.f32 %v179, %v254
    %v256 = vpop.f32.mrb[0].mxu0
    %257 = vmatprep.mubr.f32.mxu0 0.0
    %258 = vmatmul.mubr.f32.gmra.mrb[0].mxu0 %v186
    %v259 = vpop.f32.mrb[0].mxu0
    %v260 = vadd.f32 %v179, %v259
    %v261 = vpop.f32.mrb[0].mxu0
    %262 = vdwg.mxu0
    %v263 = vld [vmem:[#allocation7] sm:$0xff]
    %v264 = vld [vmem:[#allocation7 + $0x8] sm:$0xff]
    %v265 = vld [vmem:[#allocation7 + $0x10] sm:$0xff]
    %v266 = vld [vmem:[#allocation7 + $0x18] sm:$0xff]
    %v267 = vld [vmem:[%s5] sm:$0x1]
    %v269 = vlaneseq
    %v270 = vshrl.u32 %v269, 7
    %v271 = vsub.s32 0, %v270
    %v272 = vrot.slane %v267, %v271
    %v275 = vsel %vm181, 0.0, 0
    %277 = vmatprep.subr.mxu0 0.0
    %278 = vmatpush1.msra.mxu0 %v263
    %279 = vmatprep.subr.mxu0 0.0
    %280 = vmatpush1.msra.mxu0 %v264
    %281 = vmatprep.subr.mxu0 0.0
    %282 = vmatpush1.msra.mxu0 %v265
    %283 = vmatprep.subr.mxu0 0.0
    %284 = vmatpush1.msra.mxu0 %v266
    %285 = vmatprep.subr.mxu0 0.0
    %286 = vmatpush1.msra.mxu0 0.0
    %287 = vmatprep.subr.mxu0 0.0
    %288 = vmatpush1.msra.mxu0 0.0
    %289 = vmatprep.subr.mxu0 0.0
    %290 = vmatpush1.msra.mxu0 0.0
    %291 = vmatprep.subr.mxu0 0.0
    %292 = vmatpush1.msra.mxu0 0.0
    %293 = vmatprep.subr.mxu0 0.0
    %294 = vmatpush1.msra.mxu0 0.0
    %295 = vmatprep.subr.mxu0 0.0
    %296 = vmatpush1.msra.mxu0 0.0
    %297 = vmatprep.subr.mxu0 0.0
    %298 = vmatpush1.msra.mxu0 0.0
    %299 = vmatprep.subr.mxu0 0.0
    %300 = vmatpush1.msra.mxu0 0.0
    %301 = vmatprep.subr.mxu0 0.0
    %302 = vmatpush1.msra.mxu0 0.0
    %303 = vmatprep.subr.mxu0 0.0
    %304 = vmatpush1.msra.mxu0 0.0
    %305 = vmatprep.subr.mxu0 0.0
    %306 = vmatpush1.msra.mxu0 0.0
    %307 = vmatprep.subr.mxu0 0.0
    %308 = vmatpush1.msra.mxu0 0.0
    %309 = vmatprep.subr.mxu0 0.0
    %310 = vmatpush1.msra.mxu0 0.0
    %311 = vmatprep.subr.mxu0 0.0
    %312 = vmatpush1.msra.mxu0 0.0
    %313 = vmatprep.subr.mxu0 0.0
    %314 = vmatpush1.msra.mxu0 0.0
    %315 = vmatprep.subr.mxu0 0.0
    %316 = vmatpush1.msra.mxu0 0.0
    %317 = vmatprep.subr.mxu0 0.0
    %318 = vmatpush1.msra.mxu0 0.0
    %319 = vmatprep.subr.mxu0 0.0
    %320 = vmatpush1.msra.mxu0 0.0
    %321 = vmatprep.subr.mxu0 0.0
    %322 = vmatpush1.msra.mxu0 0.0
    %323 = vmatprep.subr.mxu0 0.0
    %324 = vmatpush1.msra.mxu0 0.0
    %325 = vmatprep.subr.mxu0 0.0
    %326 = vmatpush1.msra.mxu0 0.0
    %327 = vmatprep.subr.mxu0 0.0
    %328 = vmatpush1.msra.mxu0 0.0
    %329 = vmatprep.subr.mxu0 0.0
    %330 = vmatpush1.msra.mxu0 0.0
    %331 = vmatprep.subr.mxu0 0.0
    %332 = vmatpush1.msra.mxu0 0.0
    %333 = vmatprep.subr.mxu0 0.0
    %334 = vmatpush1.msra.mxu0 0.0
    %335 = vmatprep.subr.mxu0 0.0
    %336 = vmatpush1.msra.mxu0 0.0
    %337 = vmatprep.subr.mxu0 0.0
    %338 = vmatpush1.msra.mxu0 0.0
    %339 = vmatprep.subr.mxu0 0.0
    %340 = vmatpush1.msra.mxu0 0.0
    %341 = vmatprep.mubr.f32.mxu0 0.0
    %342 = vmatmul.mubr.f32.gmra.mrb[0].mxu0 %v275
    %v343 = vpop.f32.mrb[0].mxu0
    %v344 = vadd.f32 %v272, %v343
    %v345 = vpop.f32.mrb[0].mxu0
    %346 = vdwg.mxu0
    %v347 = vadd.f32 %v255, %v344
    %v348 = vxor.u32 %v347, 2147483648
    %v349 = vmul.f32 %v348, 1.442695
    %v350 = vpow.pop %v349
    %v351 = vadd.f32 %v350, 1.0
    %v352 = vrcp.pop %v351
    %v353 = vmul.f32 1.0, %v352
    %355 = vrot.lane.b32.xlu0 %v344, 64
    %v356 = vpop.permute.xlu0 %355
    %v358 = vmul.f32 %v353, %v356
    %360 = vrot.lane.b32.xlu0 %v358, 64
    %v361 = vpop.permute.xlu0 %360
    %v363 = vadd.f32 %v255, %v361
    %v364 = vtanh.pop %v363
    %v365 = vsub.f32 1.0, %v353
    %367 = vrot.lane.b32.xlu0 %v364, 96
    %v368 = vpop.permute.xlu0 %367
    %v370 = vmul.f32 %v365, %v368
    %v371 = vmul.f32 %v353, 0.0
    %v372 = vadd.f32 %v370, %v371
    %374 = vrot.lane.b32.xlu0 %v372, 96
    %v375 = vpop.permute.xlu0 %374
    %v376 = vsel %vm181, %v375, 0
    %378 = vmatprep.subr.mxu0 0.0
    %379 = vmatpush1.msra.mxu0 %v263
    %380 = vmatprep.subr.mxu0 0.0
    %381 = vmatpush1.msra.mxu0 %v264
    %382 = vmatprep.subr.mxu0 0.0
    %383 = vmatpush1.msra.mxu0 %v265
    %384 = vmatprep.subr.mxu0 0.0
    %385 = vmatpush1.msra.mxu0 %v266
    %386 = vmatprep.subr.mxu0 0.0
    %387 = vmatpush1.msra.mxu0 0.0
    %388 = vmatprep.subr.mxu0 0.0
    %389 = vmatpush1.msra.mxu0 0.0
    %390 = vmatprep.subr.mxu0 0.0
    %391 = vmatpush1.msra.mxu0 0.0
    %392 = vmatprep.subr.mxu0 0.0
    %393 = vmatpush1.msra.mxu0 0.0
    %394 = vmatprep.subr.mxu0 0.0
    %395 = vmatpush1.msra.mxu0 0.0
    %396 = vmatprep.subr.mxu0 0.0
    %397 = vmatpush1.msra.mxu0 0.0
    %398 = vmatprep.subr.mxu0 0.0
    %399 = vmatpush1.msra.mxu0 0.0
    %400 = vmatprep.subr.mxu0 0.0
    %401 = vmatpush1.msra.mxu0 0.0
    %402 = vmatprep.subr.mxu0 0.0
    %403 = vmatpush1.msra.mxu0 0.0
    %404 = vmatprep.subr.mxu0 0.0
    %405 = vmatpush1.msra.mxu0 0.0
    %406 = vmatprep.subr.mxu0 0.0
    %407 = vmatpush1.msra.mxu0 0.0
    %408 = vmatprep.subr.mxu0 0.0
    %409 = vmatpush1.msra.mxu0 0.0
    %410 = vmatprep.subr.mxu0 0.0
    %411 = vmatpush1.msra.mxu0 0.0
    %412 = vmatprep.subr.mxu0 0.0
    %413 = vmatpush1.msra.mxu0 0.0
    %414 = vmatprep.subr.mxu0 0.0
    %415 = vmatpush1.msra.mxu0 0.0
    %416 = vmatprep.subr.mxu0 0.0
    %417 = vmatpush1.msra.mxu0 0.0
    %418 = vmatprep.subr.mxu0 0.0
    %419 = vmatpush1.msra.mxu0 0.0
    %420 = vmatprep.subr.mxu0 0.0
    %421 = vmatpush1.msra.mxu0 0.0
    %422 = vmatprep.subr.mxu0 0.0
    %423 = vmatpush1.msra.mxu0 0.0
    %424 = vmatprep.subr.mxu0 0.0
    %425 = vmatpush1.msra.mxu0 0.0
    %426 = vmatprep.subr.mxu0 0.0
    %427 = vmatpush1.msra.mxu0 0.0
    %428 = vmatprep.subr.mxu0 0.0
    %429 = vmatpush1.msra.mxu0 0.0
    %430 = vmatprep.subr.mxu0 0.0
    %431 = vmatpush1.msra.mxu0 0.0
    %432 = vmatprep.subr.mxu0 0.0
    %433 = vmatpush1.msra.mxu0 0.0
    %434 = vmatprep.subr.mxu0 0.0
    %435 = vmatpush1.msra.mxu0 0.0
    %436 = vmatprep.subr.mxu0 0.0
    %437 = vmatpush1.msra.mxu0 0.0
    %438 = vmatprep.subr.mxu0 0.0
    %439 = vmatpush1.msra.mxu0 0.0
    %440 = vmatprep.subr.mxu0 0.0
    %441 = vmatpush1.msra.mxu0 0.0
    %442 = vmatprep.mubr.f32.mxu0 0.0
    %443 = vmatmul.mubr.f32.gmra.mrb[0].mxu0 %v376
    %v444 = vpop.f32.mrb[0].mxu0
    %v445 = vadd.f32 %v272, %v444
    %v446 = vpop.f32.mrb[0].mxu0
    %447 = vdwg.mxu0
    %v449 = vrot.slane %v445, 6
    %v451 = vadd.f32 %v255, %v449
    %v452 = vxor.u32 %v451, 2147483648
    %v453 = vmul.f32 %v452, 1.442695
    %v454 = vpow.pop %v453
    %v455 = vadd.f32 %v454, 1.0
    %v456 = vrcp.pop %v455
    %v457 = vmul.f32 1.0, %v456
    %458 = vrot.lane.b32.xlu0 %v449, 64
    %v459 = vpop.permute.xlu0 %458
    %v461 = vmul.f32 %v457, %v459
    %463 = vrot.lane.b32.xlu0 %v461, 64
    %v464 = vpop.permute.xlu0 %463
    %v466 = vadd.f32 %v255, %v464
    %v467 = vtanh.pop %v466
    %v468 = vsub.f32 1.0, %v457
    %470 = vrot.lane.b32.xlu0 %v467, 96
    %v471 = vpop.permute.xlu0 %470
    %v473 = vmul.f32 %v468, %v471
    %v474 = vrot.slane %v372, 6
    %v476 = vmul.f32 %v457, %v474
    %v477 = vadd.f32 %v473, %v476
    %v479 = vrot.slane %v477, 2
    %480 = vrot.lane.b32.xlu0 %v479, 96
    %v481 = vpop.permute.xlu0 %480
    %v482 = vsel %vm181, %v481, 0
    %484 = vmatprep.subr.mxu0 0.0
    %485 = vmatpush1.msra.mxu0 %v263
    %486 = vmatprep.subr.mxu0 0.0
    %487 = vmatpush1.msra.mxu0 %v264
    %488 = vmatprep.subr.mxu0 0.0
    %489 = vmatpush1.msra.mxu0 %v265
    %490 = vmatprep.subr.mxu0 0.0
    %491 = vmatpush1.msra.mxu0 %v266
    %492 = vmatprep.subr.mxu0 0.0
    %493 = vmatpush1.msra.mxu0 0.0
    %494 = vmatprep.subr.mxu0 0.0
    %495 = vmatpush1.msra.mxu0 0.0
    %496 = vmatprep.subr.mxu0 0.0
    %497 = vmatpush1.msra.mxu0 0.0
    %498 = vmatprep.subr.mxu0 0.0
    %499 = vmatpush1.msra.mxu0 0.0
    %500 = vmatprep.subr.mxu0 0.0
    %501 = vmatpush1.msra.mxu0 0.0
    %502 = vmatprep.subr.mxu0 0.0
    %503 = vmatpush1.msra.mxu0 0.0
    %504 = vmatprep.subr.mxu0 0.0
    %505 = vmatpush1.msra.mxu0 0.0
    %506 = vmatprep.subr.mxu0 0.0
    %507 = vmatpush1.msra.mxu0 0.0
    %508 = vmatprep.subr.mxu0 0.0
    %509 = vmatpush1.msra.mxu0 0.0
    %510 = vmatprep.subr.mxu0 0.0
    %511 = vmatpush1.msra.mxu0 0.0
    %512 = vmatprep.subr.mxu0 0.0
    %513 = vmatpush1.msra.mxu0 0.0
    %514 = vmatprep.subr.mxu0 0.0
    %515 = vmatpush1.msra.mxu0 0.0
    %516 = vmatprep.subr.mxu0 0.0
    %517 = vmatpush1.msra.mxu0 0.0
    %518 = vmatprep.subr.mxu0 0.0
    %519 = vmatpush1.msra.mxu0 0.0
    %520 = vmatprep.subr.mxu0 0.0
    %521 = vmatpush1.msra.mxu0 0.0
    %522 = vmatprep.subr.mxu0 0.0
    %523 = vmatpush1.msra.mxu0 0.0
    %524 = vmatprep.subr.mxu0 0.0
    %525 = vmatpush1.msra.mxu0 0.0
    %526 = vmatprep.subr.mxu0 0.0
    %527 = vmatpush1.msra.mxu0 0.0
    %528 = vmatprep.subr.mxu0 0.0
    %529 = vmatpush1.msra.mxu0 0.0
    %530 = vmatprep.subr.mxu0 0.0
    %531 = vmatpush1.msra.mxu0 0.0
    %532 = vmatprep.subr.mxu0 0.0
    %533 = vmatpush1.msra.mxu0 0.0
    %534 = vmatprep.subr.mxu0 0.0
    %535 = vmatpush1.msra.mxu0 0.0
    %536 = vmatprep.subr.mxu0 0.0
    %537 = vmatpush1.msra.mxu0 0.0
    %538 = vmatprep.subr.mxu0 0.0
    %539 = vmatpush1.msra.mxu0 0.0
    %540 = vmatprep.subr.mxu0 0.0
    %541 = vmatpush1.msra.mxu0 0.0
    %542 = vmatprep.subr.mxu0 0.0
    %543 = vmatpush1.msra.mxu0 0.0
    %544 = vmatprep.subr.mxu0 0.0
    %545 = vmatpush1.msra.mxu0 0.0
    %546 = vmatprep.subr.mxu0 0.0
    %547 = vmatpush1.msra.mxu0 0.0
    %548 = vmatprep.mubr.f32.mxu0 0.0
    %549 = vmatmul.mubr.f32.gmra.mrb[0].mxu0 %v482
    %v550 = vpop.f32.mrb[0].mxu0
    %v551 = vadd.f32 %v272, %v550
    %v552 = vpop.f32.mrb[0].mxu0
    %553 = vdwg.mxu0
    %v555 = vrot.slane %v551, 4
    %v557 = vadd.f32 %v255, %v555
    %v558 = vxor.u32 %v557, 2147483648
    %v559 = vmul.f32 %v558, 1.442695
    %v560 = vpow.pop %v559
    %v561 = vadd.f32 %v560, 1.0
    %v562 = vrcp.pop %v561
    %v563 = vmul.f32 1.0, %v562
    %564 = vrot.lane.b32.xlu0 %v555, 64
    %v565 = vpop.permute.xlu0 %564
    %v567 = vmul.f32 %v563, %v565
    %569 = vrot.lane.b32.xlu0 %v567, 64
    %v570 = vpop.permute.xlu0 %569
    %v572 = vadd.f32 %v255, %v570
    %v573 = vtanh.pop %v572
    %v574 = vsub.f32 1.0, %v563
    %576 = vrot.lane.b32.xlu0 %v573, 96
    %v577 = vpop.permute.xlu0 %576
    %v579 = vmul.f32 %v574, %v577
    %v580 = vrot.slane %v477, 6
    %v582 = vmul.f32 %v563, %v580
    %v583 = vadd.f32 %v579, %v582
    %v585 = vrot.slane %v583, 4
    %586 = vrot.lane.b32.xlu0 %v585, 96
    %v587 = vpop.permute.xlu0 %586
    %v588 = vsel %vm181, %v587, 0
    %590 = vmatprep.subr.mxu0 0.0
    %591 = vmatpush1.msra.mxu0 %v263
    %592 = vmatprep.subr.mxu0 0.0
    %593 = vmatpush1.msra.mxu0 %v264
    %594 = vmatprep.subr.mxu0 0.0
    %595 = vmatpush1.msra.mxu0 %v265
    %596 = vmatprep.subr.mxu0 0.0
    %597 = vmatpush1.msra.mxu0 %v266
    %598 = vmatprep.subr.mxu0 0.0
    %599 = vmatpush1.msra.mxu0 0.0
    %600 = vmatprep.subr.mxu0 0.0
    %601 = vmatpush1.msra.mxu0 0.0
    %602 = vmatprep.subr.mxu0 0.0
    %603 = vmatpush1.msra.mxu0 0.0
    %604 = vmatprep.subr.mxu0 0.0
    %605 = vmatpush1.msra.mxu0 0.0
    %606 = vmatprep.subr.mxu0 0.0
    %607 = vmatpush1.msra.mxu0 0.0
    %608 = vmatprep.subr.mxu0 0.0
    %609 = vmatpush1.msra.mxu0 0.0
    %610 = vmatprep.subr.mxu0 0.0
    %611 = vmatpush1.msra.mxu0 0.0
    %612 = vmatprep.subr.mxu0 0.0
    %613 = vmatpush1.msra.mxu0 0.0
    %614 = vmatprep.subr.mxu0 0.0
    %615 = vmatpush1.msra.mxu0 0.0
    %616 = vmatprep.subr.mxu0 0.0
    %617 = vmatpush1.msra.mxu0 0.0
    %618 = vmatprep.subr.mxu0 0.0
    %619 = vmatpush1.msra.mxu0 0.0
    %620 = vmatprep.subr.mxu0 0.0
    %621 = vmatpush1.msra.mxu0 0.0
    %622 = vmatprep.subr.mxu0 0.0
    %623 = vmatpush1.msra.mxu0 0.0
    %624 = vmatprep.subr.mxu0 0.0
    %625 = vmatpush1.msra.mxu0 0.0
    %626 = vmatprep.subr.mxu0 0.0
    %627 = vmatpush1.msra.mxu0 0.0
    %628 = vmatprep.subr.mxu0 0.0
    %629 = vmatpush1.msra.mxu0 0.0
    %630 = vmatprep.subr.mxu0 0.0
    %631 = vmatpush1.msra.mxu0 0.0
    %632 = vmatprep.subr.mxu0 0.0
    %633 = vmatpush1.msra.mxu0 0.0
    %634 = vmatprep.subr.mxu0 0.0
    %635 = vmatpush1.msra.mxu0 0.0
    %636 = vmatprep.subr.mxu0 0.0
    %637 = vmatpush1.msra.mxu0 0.0
    %638 = vmatprep.subr.mxu0 0.0
    %639 = vmatpush1.msra.mxu0 0.0
    %640 = vmatprep.subr.mxu0 0.0
    %641 = vmatpush1.msra.mxu0 0.0
    %642 = vmatprep.subr.mxu0 0.0
    %643 = vmatpush1.msra.mxu0 0.0
    %644 = vmatprep.subr.mxu0 0.0
    %645 = vmatpush1.msra.mxu0 0.0
    %646 = vmatprep.subr.mxu0 0.0
    %647 = vmatpush1.msra.mxu0 0.0
    %648 = vmatprep.subr.mxu0 0.0
    %649 = vmatpush1.msra.mxu0 0.0
    %650 = vmatprep.subr.mxu0 0.0
    %651 = vmatpush1.msra.mxu0 0.0
    %652 = vmatprep.subr.mxu0 0.0
    %653 = vmatpush1.msra.mxu0 0.0
    %654 = vmatprep.mubr.f32.mxu0 0.0
    %655 = vmatmul.mubr.f32.gmra.mrb[0].mxu0 %v588
    %v656 = vpop.f32.mrb[0].mxu0
    %v657 = vadd.f32 %v272, %v656
    %v658 = vpop.f32.mrb[0].mxu0
    %659 = vdwg.mxu0
    %v661 = vrot.slane %v657, 2
    %v663 = vadd.f32 %v255, %v661
    %v664 = vxor.u32 %v663, 2147483648
    %v665 = vmul.f32 %v664, 1.442695
    %v666 = vpow.pop %v665
    %v667 = vadd.f32 %v666, 1.0
    %v668 = vrcp.pop %v667
    %v669 = vmul.f32 1.0, %v668
    %670 = vrot.lane.b32.xlu0 %v661, 64
    %v671 = vpop.permute.xlu0 %670
    %v673 = vmul.f32 %v669, %v671
    %675 = vrot.lane.b32.xlu0 %v673, 64
    %v676 = vpop.permute.xlu0 %675
    %v678 = vadd.f32 %v255, %v676
    %v679 = vtanh.pop %v678
    %v680 = vsub.f32 1.0, %v669
    %682 = vrot.lane.b32.xlu0 %v679, 96
    %v683 = vpop.permute.xlu0 %682
    %v685 = vmul.f32 %v680, %v683
    %v686 = vrot.slane %v583, 6
    %v688 = vmul.f32 %v669, %v686
    %v689 = vadd.f32 %v685, %v688
    %v691 = vrot.slane %v689, 6
    %692 = vrot.lane.b32.xlu0 %v691, 96
    %v693 = vpop.permute.xlu0 %692
    %v694 = vsel %vm181, %v693, 0
    %696 = vmatprep.subr.mxu0 0.0
    %697 = vmatpush1.msra.mxu0 %v263
    %698 = vmatprep.subr.mxu0 0.0
    %699 = vmatpush1.msra.mxu0 %v264
    %700 = vmatprep.subr.mxu0 0.0
    %701 = vmatpush1.msra.mxu0 %v265
    %702 = vmatprep.subr.mxu0 0.0
    %703 = vmatpush1.msra.mxu0 %v266
    %704 = vmatprep.subr.mxu0 0.0
    %705 = vmatpush1.msra.mxu0 0.0
    %706 = vmatprep.subr.mxu0 0.0
    %707 = vmatpush1.msra.mxu0 0.0
    %708 = vmatprep.subr.mxu0 0.0
    %709 = vmatpush1.msra.mxu0 0.0
    %710 = vmatprep.subr.mxu0 0.0
    %711 = vmatpush1.msra.mxu0 0.0
    %712 = vmatprep.subr.mxu0 0.0
    %713 = vmatpush1.msra.mxu0 0.0
    %714 = vmatprep.subr.mxu0 0.0
    %715 = vmatpush1.msra.mxu0 0.0
    %716 = vmatprep.subr.mxu0 0.0
    %717 = vmatpush1.msra.mxu0 0.0
    %718 = vmatprep.subr.mxu0 0.0
    %719 = vmatpush1.msra.mxu0 0.0
    %720 = vmatprep.subr.mxu0 0.0
    %721 = vmatpush1.msra.mxu0 0.0
    %722 = vmatprep.subr.mxu0 0.0
    %723 = vmatpush1.msra.mxu0 0.0
    %724 = vmatprep.subr.mxu0 0.0
    %725 = vmatpush1.msra.mxu0 0.0
    %726 = vmatprep.subr.mxu0 0.0
    %727 = vmatpush1.msra.mxu0 0.0
    %728 = vmatprep.subr.mxu0 0.0
    %729 = vmatpush1.msra.mxu0 0.0
    %730 = vmatprep.subr.mxu0 0.0
    %731 = vmatpush1.msra.mxu0 0.0
    %732 = vmatprep.subr.mxu0 0.0
    %733 = vmatpush1.msra.mxu0 0.0
    %734 = vmatprep.subr.mxu0 0.0
    %735 = vmatpush1.msra.mxu0 0.0
    %736 = vmatprep.subr.mxu0 0.0
    %737 = vmatpush1.msra.mxu0 0.0
    %738 = vmatprep.subr.mxu0 0.0
    %739 = vmatpush1.msra.mxu0 0.0
    %740 = vmatprep.subr.mxu0 0.0
    %741 = vmatpush1.msra.mxu0 0.0
    %742 = vmatprep.subr.mxu0 0.0
    %743 = vmatpush1.msra.mxu0 0.0
    %744 = vmatprep.subr.mxu0 0.0
    %745 = vmatpush1.msra.mxu0 0.0
    %746 = vmatprep.subr.mxu0 0.0
    %747 = vmatpush1.msra.mxu0 0.0
    %748 = vmatprep.subr.mxu0 0.0
    %749 = vmatpush1.msra.mxu0 0.0
    %750 = vmatprep.subr.mxu0 0.0
    %751 = vmatpush1.msra.mxu0 0.0
    %752 = vmatprep.subr.mxu0 0.0
    %753 = vmatpush1.msra.mxu0 0.0
    %754 = vmatprep.subr.mxu0 0.0
    %755 = vmatpush1.msra.mxu0 0.0
    %756 = vmatprep.subr.mxu0 0.0
    %757 = vmatpush1.msra.mxu0 0.0
    %758 = vmatprep.subr.mxu0 0.0
    %759 = vmatpush1.msra.mxu0 0.0
    %760 = vmatprep.mubr.f32.mxu0 0.0
    %761 = vmatmul.mubr.f32.gmra.mrb[0].mxu0 %v694
    %v762 = vpop.f32.mrb[0].mxu0
    %v763 = vadd.f32 %v272, %v762
    %v764 = vpop.f32.mrb[0].mxu0
    %765 = vdwg.mxu0
    %v766 = vadd.f32 %v260, %v763
    %v767 = vxor.u32 %v766, 2147483648
    %v768 = vmul.f32 %v767, 1.442695
    %v769 = vpow.pop %v768
    %v770 = vadd.f32 %v769, 1.0
    %v771 = vrcp.pop %v770
    %v772 = vmul.f32 1.0, %v771
    %774 = vrot.lane.b32.xlu0 %v763, 64
    %v775 = vpop.permute.xlu0 %774
    %v777 = vmul.f32 %v772, %v775
    %779 = vrot.lane.b32.xlu0 %v777, 64
    %v780 = vpop.permute.xlu0 %779
    %v782 = vadd.f32 %v260, %v780
    %v783 = vtanh.pop %v782
    %v784 = vsub.f32 1.0, %v772
    %786 = vrot.lane.b32.xlu0 %v783, 96
    %v787 = vpop.permute.xlu0 %786
    %v789 = vmul.f32 %v784, %v787
    %v791 = vmul.f32 %v772, %v691
    %v792 = vadd.f32 %v789, %v791
    %794 = vrot.lane.b32.xlu0 %v792, 96
    %v795 = vpop.permute.xlu0 %794
    %v796 = vsel %vm181, %v795, 0
    %798 = vmatprep.subr.mxu0 0.0
    %799 = vmatpush1.msra.mxu0 %v263
    %800 = vmatprep.subr.mxu0 0.0
    %801 = vmatpush1.msra.mxu0 %v264
    %802 = vmatprep.subr.mxu0 0.0
    %803 = vmatpush1.msra.mxu0 %v265
    %804 = vmatprep.subr.mxu0 0.0
    %805 = vmatpush1.msra.mxu0 %v266
    %806 = vmatprep.subr.mxu0 0.0
    %807 = vmatpush1.msra.mxu0 0.0
    %808 = vmatprep.subr.mxu0 0.0
    %809 = vmatpush1.msra.mxu0 0.0
    %810 = vmatprep.subr.mxu0 0.0
    %811 = vmatpush1.msra.mxu0 0.0
    %812 = vmatprep.subr.mxu0 0.0
    %813 = vmatpush1.msra.mxu0 0.0
    %814 = vmatprep.subr.mxu0 0.0
    %815 = vmatpush1.msra.mxu0 0.0
    %816 = vmatprep.subr.mxu0 0.0
    %817 = vmatpush1.msra.mxu0 0.0
    %818 = vmatprep.subr.mxu0 0.0
    %819 = vmatpush1.msra.mxu0 0.0
    %820 = vmatprep.subr.mxu0 0.0
    %821 = vmatpush1.msra.mxu0 0.0
    %822 = vmatprep.subr.mxu0 0.0
    %823 = vmatpush1.msra.mxu0 0.0
    %824 = vmatprep.subr.mxu0 0.0
    %825 = vmatpush1.msra.mxu0 0.0
    %826 = vmatprep.subr.mxu0 0.0
    %827 = vmatpush1.msra.mxu0 0.0
    %828 = vmatprep.subr.mxu0 0.0
    %829 = vmatpush1.msra.mxu0 0.0
    %830 = vmatprep.subr.mxu0 0.0
    %831 = vmatpush1.msra.mxu0 0.0
    %832 = vmatprep.subr.mxu0 0.0
    %833 = vmatpush1.msra.mxu0 0.0
    %834 = vmatprep.subr.mxu0 0.0
    %835 = vmatpush1.msra.mxu0 0.0
    %836 = vmatprep.subr.mxu0 0.0
    %837 = vmatpush1.msra.mxu0 0.0
    %838 = vmatprep.subr.mxu0 0.0
    %839 = vmatpush1.msra.mxu0 0.0
    %840 = vmatprep.subr.mxu0 0.0
    %841 = vmatpush1.msra.mxu0 0.0
    %842 = vmatprep.subr.mxu0 0.0
    %843 = vmatpush1.msra.mxu0 0.0
    %844 = vmatprep.subr.mxu0 0.0
    %845 = vmatpush1.msra.mxu0 0.0
    %846 = vmatprep.subr.mxu0 0.0
    %847 = vmatpush1.msra.mxu0 0.0
    %848 = vmatprep.subr.mxu0 0.0
    %849 = vmatpush1.msra.mxu0 0.0
    %850 = vmatprep.subr.mxu0 0.0
    %851 = vmatpush1.msra.mxu0 0.0
    %852 = vmatprep.subr.mxu0 0.0
    %853 = vmatpush1.msra.mxu0 0.0
    %854 = vmatprep.subr.mxu0 0.0
    %855 = vmatpush1.msra.mxu0 0.0
    %856 = vmatprep.subr.mxu0 0.0
    %857 = vmatpush1.msra.mxu0 0.0
    %858 = vmatprep.subr.mxu0 0.0
    %859 = vmatpush1.msra.mxu0 0.0
    %860 = vmatprep.subr.mxu0 0.0
    %861 = vmatpush1.msra.mxu0 0.0
    %862 = vmatprep.mubr.f32.mxu0 0.0
    %863 = vmatmul.mubr.f32.gmra.mrb[0].mxu0 %v796
    %v864 = vpop.f32.mrb[0].mxu0
    %v865 = vadd.f32 %v272, %v864
    %v866 = vpop.f32.mrb[0].mxu0
    %867 = vdwg.mxu0
    %v869 = vrot.slane %v865, 6
    %v871 = vadd.f32 %v260, %v869
    %v872 = vxor.u32 %v871, 2147483648
    %v873 = vmul.f32 %v872, 1.442695
    %v874 = vpow.pop %v873
    %v875 = vadd.f32 %v874, 1.0
    %v876 = vrcp.pop %v875
    %v877 = vmul.f32 1.0, %v876
    %878 = vrot.lane.b32.xlu0 %v869, 64
    %v879 = vpop.permute.xlu0 %878
    %v881 = vmul.f32 %v877, %v879
    %883 = vrot.lane.b32.xlu0 %v881, 64
    %v884 = vpop.permute.xlu0 %883
    %v886 = vadd.f32 %v260, %v884
    %v887 = vtanh.pop %v886
    %v888 = vsub.f32 1.0, %v877
    %890 = vrot.lane.b32.xlu0 %v887, 96
    %v891 = vpop.permute.xlu0 %890
    %v893 = vmul.f32 %v888, %v891
    %v894 = vrot.slane %v792, 6
    %v896 = vmul.f32 %v877, %v894
    %v897 = vadd.f32 %v893, %v896
    %v899 = vrot.slane %v897, 2
    %900 = vrot.lane.b32.xlu0 %v899, 96
    %v901 = vpop.permute.xlu0 %900
    %v902 = vsel %vm181, %v901, 0
    %904 = vmatprep.subr.mxu0 0.0
    %905 = vmatpush1.msra.mxu0 %v263
    %906 = vmatprep.subr.mxu0 0.0
    %907 = vmatpush1.msra.mxu0 %v264
    %908 = vmatprep.subr.mxu0 0.0
    %909 = vmatpush1.msra.mxu0 %v265
    %910 = vmatprep.subr.mxu0 0.0
    %911 = vmatpush1.msra.mxu0 %v266
    %912 = vmatprep.subr.mxu0 0.0
    %913 = vmatpush1.msra.mxu0 0.0
    %914 = vmatprep.subr.mxu0 0.0
    %915 = vmatpush1.msra.mxu0 0.0
    %916 = vmatprep.subr.mxu0 0.0
    %917 = vmatpush1.msra.mxu0 0.0
    %918 = vmatprep.subr.mxu0 0.0
    %919 = vmatpush1.msra.mxu0 0.0
    %920 = vmatprep.subr.mxu0 0.0
    %921 = vmatpush1.msra.mxu0 0.0
    %922 = vmatprep.subr.mxu0 0.0
    %923 = vmatpush1.msra.mxu0 0.0
    %924 = vmatprep.subr.mxu0 0.0
    %925 = vmatpush1.msra.mxu0 0.0
    %926 = vmatprep.subr.mxu0 0.0
    %927 = vmatpush1.msra.mxu0 0.0
    %928 = vmatprep.subr.mxu0 0.0
    %929 = vmatpush1.msra.mxu0 0.0
    %930 = vmatprep.subr.mxu0 0.0
    %931 = vmatpush1.msra.mxu0 0.0
    %932 = vmatprep.subr.mxu0 0.0
    %933 = vmatpush1.msra.mxu0 0.0
    %934 = vmatprep.subr.mxu0 0.0
    %935 = vmatpush1.msra.mxu0 0.0
    %936 = vmatprep.subr.mxu0 0.0
    %937 = vmatpush1.msra.mxu0 0.0
    %938 = vmatprep.subr.mxu0 0.0
    %939 = vmatpush1.msra.mxu0 0.0
    %940 = vmatprep.subr.mxu0 0.0
    %941 = vmatpush1.msra.mxu0 0.0
    %942 = vmatprep.subr.mxu0 0.0
    %943 = vmatpush1.msra.mxu0 0.0
    %944 = vmatprep.subr.mxu0 0.0
    %945 = vmatpush1.msra.mxu0 0.0
    %946 = vmatprep.subr.mxu0 0.0
    %947 = vmatpush1.msra.mxu0 0.0
    %948 = vmatprep.subr.mxu0 0.0
    %949 = vmatpush1.msra.mxu0 0.0
    %950 = vmatprep.subr.mxu0 0.0
    %951 = vmatpush1.msra.mxu0 0.0
    %952 = vmatprep.subr.mxu0 0.0
    %953 = vmatpush1.msra.mxu0 0.0
    %954 = vmatprep.subr.mxu0 0.0
    %955 = vmatpush1.msra.mxu0 0.0
    %956 = vmatprep.subr.mxu0 0.0
    %957 = vmatpush1.msra.mxu0 0.0
    %958 = vmatprep.subr.mxu0 0.0
    %959 = vmatpush1.msra.mxu0 0.0
    %960 = vmatprep.subr.mxu0 0.0
    %961 = vmatpush1.msra.mxu0 0.0
    %962 = vmatprep.subr.mxu0 0.0
    %963 = vmatpush1.msra.mxu0 0.0
    %964 = vmatprep.subr.mxu0 0.0
    %965 = vmatpush1.msra.mxu0 0.0
    %966 = vmatprep.subr.mxu0 0.0
    %967 = vmatpush1.msra.mxu0 0.0
    %968 = vmatprep.mubr.f32.mxu0 0.0
    %969 = vmatmul.mubr.f32.gmra.mrb[0].mxu0 %v902
    %v970 = vpop.f32.mrb[0].mxu0
    %v971 = vadd.f32 %v272, %v970
    %v972 = vpop.f32.mrb[0].mxu0
    %973 = vdwg.mxu0
    %v975 = vrot.slane %v971, 4
    %v977 = vadd.f32 %v260, %v975
    %v978 = vxor.u32 %v977, 2147483648
    %v979 = vmul.f32 %v978, 1.442695
    %v980 = vpow.pop %v979
    %v981 = vadd.f32 %v980, 1.0
    %v982 = vrcp.pop %v981
    %v983 = vmul.f32 1.0, %v982
    %984 = vrot.lane.b32.xlu0 %v975, 64
    %v985 = vpop.permute.xlu0 %984
    %v987 = vmul.f32 %v983, %v985
    %989 = vrot.lane.b32.xlu0 %v987, 64
    %v990 = vpop.permute.xlu0 %989
    %v992 = vadd.f32 %v260, %v990
    %v993 = vtanh.pop %v992
    %v994 = vsub.f32 1.0, %v983
    %996 = vrot.lane.b32.xlu0 %v993, 96
    %v997 = vpop.permute.xlu0 %996
    %v999 = vmul.f32 %v994, %v997
    %v1000 = vrot.slane %v897, 6
    %v1002 = vmul.f32 %v983, %v1000
    %v1003 = vadd.f32 %v999, %v1002
    %v1005 = vrot.slane %v1003, 4
    %1006 = vrot.lane.b32.xlu0 %v1005, 96
    %v1007 = vpop.permute.xlu0 %1006
    %v1008 = vsel %vm181, %v1007, 0
    %1010 = vmatprep.subr.mxu0 0.0
    %1011 = vmatpush1.msra.mxu0 %v263
    %1012 = vmatprep.subr.mxu0 0.0
    %1013 = vmatpush1.msra.mxu0 %v264
    %1014 = vmatprep.subr.mxu0 0.0
    %1015 = vmatpush1.msra.mxu0 %v265
    %1016 = vmatprep.subr.mxu0 0.0
    %1017 = vmatpush1.msra.mxu0 %v266
    %1018 = vmatprep.subr.mxu0 0.0
    %1019 = vmatpush1.msra.mxu0 0.0
    %1020 = vmatprep.subr.mxu0 0.0
    %1021 = vmatpush1.msra.mxu0 0.0
    %1022 = vmatprep.subr.mxu0 0.0
    %1023 = vmatpush1.msra.mxu0 0.0
    %1024 = vmatprep.subr.mxu0 0.0
    %1025 = vmatpush1.msra.mxu0 0.0
    %1026 = vmatprep.subr.mxu0 0.0
    %1027 = vmatpush1.msra.mxu0 0.0
    %1028 = vmatprep.subr.mxu0 0.0
    %1029 = vmatpush1.msra.mxu0 0.0
    %1030 = vmatprep.subr.mxu0 0.0
    %1031 = vmatpush1.msra.mxu0 0.0
    %1032 = vmatprep.subr.mxu0 0.0
    %1033 = vmatpush1.msra.mxu0 0.0
    %1034 = vmatprep.subr.mxu0 0.0
    %1035 = vmatpush1.msra.mxu0 0.0
    %1036 = vmatprep.subr.mxu0 0.0
    %1037 = vmatpush1.msra.mxu0 0.0
    %1038 = vmatprep.subr.mxu0 0.0
    %1039 = vmatpush1.msra.mxu0 0.0
    %1040 = vmatprep.subr.mxu0 0.0
    %1041 = vmatpush1.msra.mxu0 0.0
    %1042 = vmatprep.subr.mxu0 0.0
    %1043 = vmatpush1.msra.mxu0 0.0
    %1044 = vmatprep.subr.mxu0 0.0
    %1045 = vmatpush1.msra.mxu0 0.0
    %1046 = vmatprep.subr.mxu0 0.0
    %1047 = vmatpush1.msra.mxu0 0.0
    %1048 = vmatprep.subr.mxu0 0.0
    %1049 = vmatpush1.msra.mxu0 0.0
    %1050 = vmatprep.subr.mxu0 0.0
    %1051 = vmatpush1.msra.mxu0 0.0
    %1052 = vmatprep.subr.mxu0 0.0
    %1053 = vmatpush1.msra.mxu0 0.0
    %1054 = vmatprep.subr.mxu0 0.0
    %1055 = vmatpush1.msra.mxu0 0.0
    %1056 = vmatprep.subr.mxu0 0.0
    %1057 = vmatpush1.msra.mxu0 0.0
    %1058 = vmatprep.subr.mxu0 0.0
    %1059 = vmatpush1.msra.mxu0 0.0
    %1060 = vmatprep.subr.mxu0 0.0
    %1061 = vmatpush1.msra.mxu0 0.0
    %1062 = vmatprep.subr.mxu0 0.0
    %1063 = vmatpush1.msra.mxu0 0.0
    %1064 = vmatprep.subr.mxu0 0.0
    %1065 = vmatpush1.msra.mxu0 0.0
    %1066 = vmatprep.subr.mxu0 0.0
    %1067 = vmatpush1.msra.mxu0 0.0
    %1068 = vmatprep.subr.mxu0 0.0
    %1069 = vmatpush1.msra.mxu0 0.0
    %1070 = vmatprep.subr.mxu0 0.0
    %1071 = vmatpush1.msra.mxu0 0.0
    %1072 = vmatprep.subr.mxu0 0.0
    %1073 = vmatpush1.msra.mxu0 0.0
    %1074 = vmatprep.mubr.f32.mxu0 0.0
    %1075 = vmatmul.mubr.f32.gmra.mrb[0].mxu0 %v1008
    %v1076 = vpop.f32.mrb[0].mxu0
    %v1077 = vadd.f32 %v272, %v1076
    %v1078 = vpop.f32.mrb[0].mxu0
    %1079 = vdwg.mxu0
    %v1081 = vrot.slane %v1077, 2
    %v1083 = vadd.f32 %v260, %v1081
    %v1084 = vxor.u32 %v1083, 2147483648
    %v1085 = vmul.f32 %v1084, 1.442695
    %v1086 = vpow.pop %v1085
    %v1087 = vadd.f32 %v1086, 1.0
    %v1088 = vrcp.pop %v1087
    %v1089 = vmul.f32 1.0, %v1088
    %1090 = vrot.lane.b32.xlu0 %v1081, 64
    %v1091 = vpop.permute.xlu0 %1090
    %v1093 = vmul.f32 %v1089, %v1091
    %1095 = vrot.lane.b32.xlu0 %v1093, 64
    %v1096 = vpop.permute.xlu0 %1095
    %v1098 = vadd.f32 %v260, %v1096
    %v1099 = vtanh.pop %v1098
    %v1100 = vsub.f32 1.0, %v1089
    %1102 = vrot.lane.b32.xlu0 %v1099, 96
    %v1103 = vpop.permute.xlu0 %1102
    %v1105 = vmul.f32 %v1100, %v1103
    %v1106 = vrot.slane %v1003, 6
    %v1108 = vmul.f32 %v1089, %v1106
    %v1109 = vadd.f32 %v1105, %v1108
    %1111 = vrot.lane.b32.xlu0 %v1109, 96
    %v1112 = vpop.permute.xlu0 %1111
    %vm1114 = vcmask 261126
    %1115 = vst.msk [vmem:[#allocation8 - $0x6] sm:$0xc0] %vm1114, %v1112
    // Predicated region
    $region38: #{tpu_custom_call.1} parent=1 // pred_check
      _
    $region39: #{tpu_custom_call.1} parent=1 // pred_check_branch
      %1117 = sbr.rel (0) target = $region41
    $region40: #{tpu_custom_call.1} parent=1 // pred_region
      %s1119 = ssub.s32 32, 32
      %1120 = vsyncadd [#allocation4], %s1119
      %s1122 = sshll.u32 [#allocation8], 4
      %s1123 = int_to_ptr.vmem [resolvable:$true] %s1122
      %1125 = dma.vmem_to_hbm [thread:$0]  %s1123, 32, %s6, [#allocation4]
    $region41: #{tpu_custom_call.1} parent=1 // pred_fallthru
      _
    // Predicated region
    $region42: #{tpu_custom_call.1} parent=1 // pred_check
      _
    $region43: #{tpu_custom_call.1} parent=1 // pred_check_branch
      %1127 = sbr.rel (0) target = $region45
    $region44: #{tpu_custom_call.1} parent=1 // pred_region
      %1128 = dma.done [#allocation4], 32
    $region45: #{tpu_custom_call.1} parent=1 // pred_fallthru
      _
    %1129 = vsyncpa [#allocation3], 1
    %1130 = vsyncpa [#allocation6], 1
    %1131 = vsyncpa [#allocation4], 1

</llo_original>
